<compile_context>
chip_gen: v7x
topology: tpu7x:2x2x1
jax: 0.10.0
libtpu: 0.0.40
codegen_flags: <defaults>
</compile_context>

<pallas_src>
import functools

import jax
import jax.numpy as jnp
from jax.experimental import pallas as pl
from jax.experimental.pallas import tpu as pltpu

_LANES = 128
_SUBLANES = 8
_MAX_ROW_BLOCK = 1024  # rows of 128 lanes per grid step (512 KiB f32 per input)


def _mse_partial_kernel(x_ref, t_ref, out_ref, *, rows_valid, needs_mask):
    """Writes an (8, 128) tile of partial sums of (x - t)^2 for this block."""
    rb = x_ref.shape[0]  # static block row count
    d = x_ref[...].astype(jnp.float32) - t_ref[...].astype(jnp.float32)
    dd = d * d

    if needs_mask:
        # Rows past `rows_valid` in the final (partial) block hold unspecified
        # data; zero them out.  (jnp.where also squashes any NaN garbage.)
        row = (jax.lax.broadcasted_iota(jnp.int32, dd.shape, 0)
               + pl.program_id(0) * rb)
        dd = jnp.where(row < rows_valid, dd, jnp.float32(0.0))

    if rb % _SUBLANES == 0:
        # Pure-VPU fold of the row blocks into one (8, 128) vreg of partials.
        out_ref[...] = dd.reshape(rb // _SUBLANES, _SUBLANES, _LANES).sum(axis=0)
    else:
        # Tiny-input fallback (rows < 8 or a single odd-sized block): reduce to
        # one row and place it in sublane 0 of the output tile.
        s = jnp.sum(dd, axis=0, keepdims=True)  # (1, 128)
        sub = jax.lax.broadcasted_iota(jnp.int32, (_SUBLANES, _LANES), 0)
        out_ref[...] = jnp.where(sub == 0,
                                 jnp.broadcast_to(s, (_SUBLANES, _LANES)),
                                 jnp.float32(0.0))


def _prepare(x):
    """Flatten a feature map to (rows, 128) in its NATIVE dtype.

    Only pads (with zeros) when the element count is not a lane multiple;
    row-block tails are handled by in-kernel masking, not padding.
    """
    flat = x.reshape(-1)
    n = flat.shape[0]
    rem = n % _LANES
    if rem:
        flat = jnp.pad(flat, (0, _LANES - rem))
    return flat.reshape(-1, _LANES), n


def _mse_2d_pallas(x2d, t2d, n_elements):
    rows = x2d.shape[0]
    row_block = rows if rows <= _MAX_ROW_BLOCK else _MAX_ROW_BLOCK
    grid_rows = pl.cdiv(rows, row_block)
    needs_mask = (rows % row_block) != 0

    kernel = functools.partial(
        _mse_partial_kernel, rows_valid=rows, needs_mask=needs_mask)

    partials = pl.pallas_call(
        kernel,
        out_shape=jax.ShapeDtypeStruct((grid_rows * _SUBLANES, _LANES),
                                       jnp.float32),
        grid=(grid_rows,),
        in_specs=[
            pl.BlockSpec((row_block, _LANES), lambda i: (i, 0)),
            pl.BlockSpec((row_block, _LANES), lambda i: (i, 0)),
        ],
        out_specs=pl.BlockSpec((_SUBLANES, _LANES), lambda i: (i, 0)),
        compiler_params=pltpu.CompilerParams(
            dimension_semantics=("parallel",),  # no cross-step carry -> megacore OK
        ),
    )(x2d, t2d)

    # Tiny final reduction (<< 1% of the input traffic) done in the wrapper.
    return jnp.sum(partials) * jnp.float32(1.0 / n_elements)


@functools.partial(jax.jit, static_argnames=("n_elements",))
def _content_mse(x, t2d, n_elements):
    x2d, _ = _prepare(x)
    return _mse_2d_pallas(x2d, t2d, n_elements)


class ContentLoss:
    """JAX/Pallas port of the PyTorch ContentLoss module.

    Holds a fixed (detached) target feature map.  forward(x) computes
    MSE(x, target) with a Pallas TPU reduction kernel, stores it in
    self.loss, and returns x unchanged.
    """

    def __init__(self, target):
        self.target = jax.lax.stop_gradient(target)  # .detach()
        # Cache the flattened/padded target once (perf review item).
        self._t2d, self._n = _prepare(self.target)
        # Mirror PyTorch: __init__ computes mse_loss(target, target) == 0.
        self.loss = _content_mse(self.target, self._t2d, self._n)

    def forward(self, x):
        # TODO(synk): self.loss is mutable Python state (mirrors the PyTorch
        # module); it will not compose with jax.jit applied over the caller.
        self.loss = _content_mse(x, self._t2d, self._n)
        return x  # pass-through, identical to the PyTorch module

    __call__ = forward


if __name__ == "__main__":
    # Small NCHW feature-map shapes consistent with the module's usage.
    B, C, H, W = 2, 4, 16, 16
    key = jax.random.PRNGKey(0)
    k_t, k_x = jax.random.split(key)
    target = jax.random.normal(k_t, (B, C, H, W), dtype=jnp.float32)
    x = jax.random.normal(k_x, (B, C, H, W), dtype=jnp.float32)

    module = ContentLoss(target)
    out = module(x)
    out = jax.block_until_ready(out)
    loss = jax.block_until_ready(module.loss)

    ref_loss = jnp.mean((x - target) ** 2)
    assert out.shape == x.shape and out.dtype == x.dtype
    assert bool(jnp.allclose(out, x)), "forward must return input unchanged"
    assert bool(jnp.allclose(loss, ref_loss, rtol=1e-5, atol=1e-6)), (
        f"loss mismatch: {loss} vs {ref_loss}")
    assert bool(jnp.allclose(ContentLoss(target).loss, 0.0)), \
        "__init__ loss must be 0"

    # Extra sanity check: multi-block grid + in-kernel tail masking path.
    k_t2, k_x2 = jax.random.split(jax.random.PRNGKey(1))
    t2 = jax.random.normal(k_t2, (2, 8, 96, 96), dtype=jnp.float32)
    x2 = jax.random.normal(k_x2, (2, 8, 96, 96), dtype=jnp.float32)
    m2 = ContentLoss(t2)
    _ = jax.block_until_ready(m2(x2))
    loss2 = jax.block_until_ready(m2.loss)
    ref2 = jnp.mean((x2 - t2) ** 2)
    assert bool(jnp.allclose(loss2, ref2, rtol=1e-5, atol=1e-6)), (
        f"loss mismatch (masked path): {loss2} vs {ref2}")

    print("KERNEL_OK")
</pallas_src>

<mosaic_0001>
module attributes {stable_mosaic.version = 11 : i64} {
  func.func @_mse_partial_kernel(%arg0: i32, %arg1: memref<16x128xf32, #tpu.memory_space<vmem>>, %arg2: memref<16x128xf32, #tpu.memory_space<vmem>>, %arg3: memref<8x128xf32, #tpu.memory_space<vmem>>) attributes {dimension_semantics = [#tpu.dimension_semantics<parallel>], iteration_bounds = array<i64: 1>, scalar_prefetch = 0 : i64, scratch_operands = 0 : i64, tpu.core_type = #tpu.core_type<tc>, window_params = [{transform_indices = @transform_0, window_bounds = array<i64: 16, 128>}, {transform_indices = @transform_1, window_bounds = array<i64: 16, 128>}, {transform_indices = @transform_2, window_bounds = array<i64: 8, 128>}]} {
    %c0 = arith.constant 0 : index
    %c0_0 = arith.constant 0 : index
    %0 = vector.load %arg1[%c0, %c0_0] : memref<16x128xf32, #tpu.memory_space<vmem>>, vector<16x128xf32>
    %c0_1 = arith.constant 0 : index
    %c0_2 = arith.constant 0 : index
    %1 = vector.load %arg2[%c0_1, %c0_2] : memref<16x128xf32, #tpu.memory_space<vmem>>, vector<16x128xf32>
    %2 = arith.subf %0, %1 : vector<16x128xf32>
    %3 = arith.mulf %2, %2 : vector<16x128xf32>
    %4 = vector.shape_cast %3 : vector<16x128xf32> to vector<2x8x128xf32>
    %cst = arith.constant dense<0.000000e+00> : vector<8x128xf32>
    %5 = vector.multi_reduction <add>, %4, %cst [0] : vector<2x8x128xf32> to vector<8x128xf32>
    %c0_3 = arith.constant 0 : index
    %c0_4 = arith.constant 0 : index
    %6 = vector.load %arg3[%c0_3, %c0_4] : memref<8x128xf32, #tpu.memory_space<vmem>>, vector<8x128xf32>
    tpu.vector_store %arg3[%c0_3, %c0_4], %5 {strides = array<i32>} : memref<8x128xf32, #tpu.memory_space<vmem>>, vector<8x128xf32>,
    return
  }
  func.func @transform_0(%arg0: i32) -> (i32, i32) {
    %c0_i32 = arith.constant 0 : i32
    %c0_i32_0 = arith.constant 0 : i32
    return %arg0, %c0_i32 : i32, i32
  }
  func.func @transform_1(%arg0: i32) -> (i32, i32) {
    %c0_i32 = arith.constant 0 : i32
    %c0_i32_0 = arith.constant 0 : i32
    return %arg0, %c0_i32 : i32, i32
  }
  func.func @transform_2(%arg0: i32) -> (i32, i32) {
    %c0_i32 = arith.constant 0 : i32
    %c0_i32_0 = arith.constant 0 : i32
    return %arg0, %c0_i32 : i32, i32
  }
}

</mosaic_0001>

<llo_original>
// kernel: _content_mse.1
$region0: #{_content_mse.1}
  #allocation0 [shape = 'u32[]', space=smem, size = 0x4, offset = 0x4, fixed_abs, tag = 'smem constant byte address 0x4 - core index']
  #allocation1 [shape = 'u32[144,128]{1,0:T(1,128)}', space=vmem, size = 0x12000, scoped, tag = 'internal scratch']
  %s0 = inlined_call_operand.vmem [shape: f32[16,128], index: 0, kind: input, shape index: {}]
  %s1 = inlined_call_operand.vmem [shape: f32[16,128], index: 1, kind: input, shape index: {}]
  %s2 = inlined_call_operand.vmem [shape: f32[8,128], index: 2, kind: output, shape index: {}]
  %s3 = sld [smem:[#allocation0]]
  $region18: #{_content_mse.1} parent=0
    _
  %s5 = ssub.s32 1, %s3
  %s6 = scalar_select 0, %s5, %s3
  // Predicated region
  $region2: #{_content_mse.1} parent=0 // pred_check
    _
  $region3: #{_content_mse.1} parent=0 // pred_check_branch
    %8 = sbr.rel (0) target = $region5
  $region4: #{_content_mse.1} parent=0 // pred_region
    _
  $region5: #{_content_mse.1} parent=0 // pred_fallthru
    _
  // Predicated region
  $region6: #{_content_mse.1} parent=0 // pred_check
    _
  $region7: #{_content_mse.1} parent=0 // pred_check_branch
    %10 = sbr.rel (0) target = $region9
  $region8: #{_content_mse.1} parent=0 // pred_region
    _
  $region9: #{_content_mse.1} parent=0 // pred_fallthru
    _
  %v11 = vld [vmem:[%s0] sm:$0xff]
  %v12 = vld [vmem:[%s0 + $0x8] sm:$0xff]
  %v13 = vld [vmem:[%s1] sm:$0xff]
  %v14 = vld [vmem:[%s1 + $0x8] sm:$0xff]
  %v15 = vsub.f32 %v11, %v13
  %v16 = vsub.f32 %v12, %v14
  %v17 = vmul.f32 %v15, %v15
  %v18 = vmul.f32 %v16, %v16
  %v19 = vadd.f32 %v17, %v18
  %20 = vst [vmem:[%s2] sm:$0xff] %v19
  // Predicated region
  $region10: #{_content_mse.1} parent=0 // pred_check
    _
  $region11: #{_content_mse.1} parent=0 // pred_check_branch
    %22 = sbr.rel (0) target = $region13
  $region12: #{_content_mse.1} parent=0 // pred_region
    _
  $region13: #{_content_mse.1} parent=0 // pred_fallthru
    _
  // Predicated region
  $region14: #{_content_mse.1} parent=0 // pred_check
    _
  $region15: #{_content_mse.1} parent=0 // pred_check_branch
    %24 = sbr.rel (0) target = $region17
  $region16: #{_content_mse.1} parent=0 // pred_region
    _
  $region17: #{_content_mse.1} parent=0 // pred_fallthru
    _

</llo_original>
